<compile_context>
chip_gen: v6e
topology: v6e:2x2x1
jax: 0.10.0
libtpu: 0.0.40
codegen_flags: <defaults>
</compile_context>

<pallas_src>
import functools

import jax
import jax.numpy as jnp
from jax import lax
from jax.experimental import pallas as pl
from jax.experimental.pallas import tpu as pltpu


_LANE = 128
_NUM_COL_SPLITS = 2           # leading "parallel" axis → 2-way megacore on v7x
_PALLAS_MIN_BYTES = 256 * 1024


def _budgets():
    """(per-step input tile bytes, scoped vmem limit bytes), per generation."""
    kind = ""
    try:
        kind = jax.devices()[0].device_kind.lower()
    except Exception:
        pass
    if "v5" in kind:   # ~0.8 TB/s HBM: small tiles already amortize step cost
        return 4 * 1024 * 1024, 24 * 1024 * 1024
    if "v7" in kind:   # ~3.2 TB/s HBM, 64 MiB physical VMEM per TC
        return 10 * 1024 * 1024, 44 * 1024 * 1024
    return 8 * 1024 * 1024, 40 * 1024 * 1024      # v6e default


def _channel_sum_kernel(x_ref, out_ref, *, hw, tn, n_ct_per_split):
    """x_ref: (BC, tn) tile of the (BC, HW) view.  out_ref: (1, BC, 1) f32.

    Grid = (col_split [parallel], col_tile [arbitrary]).  out_ref's index_map
    is constant along the column axis, so it stays resident in VMEM and is
    written back to HBM once per split.
    """
    s = pl.program_id(0)
    k = pl.program_id(1)

    @pl.when(k == 0)
    def _init():
        out_ref[...] = jnp.zeros_like(out_ref)

    # Global column offset of this tile, UNclamped: a duplicate tile (odd tile
    # count split 2 ways) gets an all-false mask and contributes nothing.
    col0 = (s * n_ct_per_split + k) * tn
    col = col0 + lax.broadcasted_iota(jnp.int32, x_ref.shape, 1)
    x = jnp.where(col < hw, x_ref[...], 0)        # mask ragged / duplicate cols
    # Fold dtype widening into the reduction; accumulate in f32.
    out_ref[...] += jnp.sum(x, axis=1, keepdims=True,
                            dtype=jnp.float32).reshape(out_ref.shape)


def color_loss_ref(x):
    """Pure-JAX reference (matches the PyTorch module)."""
    mean_rgb = jnp.mean(x, axis=(2, 3), keepdims=True)      # (B, 3, 1, 1)
    mr, mg, mb = jnp.split(mean_rgb, 3, axis=1)
    Dr = (mr - 0.5) ** 2
    Dg = (mg - 0.5) ** 2
    Db = (mb - 0.5) ** 2
    return jnp.sqrt(Dr ** 2 + Dg ** 2 + Db ** 2)            # (B, 1, 1, 1)


def color_loss(x, *, force_pallas=False, max_tile_bytes=None):
    """x: (B, 3, H, W). Returns (B, 1, 1, 1), matching PyTorch ColorLoss."""
    B, C, H, W = x.shape
    assert C == 3, "ColorLoss expects 3 channels (RGB)"
    HW = H * W
    BC = B * C
    itemsize = jnp.dtype(x.dtype).itemsize

    # Tiny inputs: fixed pallas_call + grid setup cost exceeds the reduction.
    if not force_pallas and BC * HW * itemsize < _PALLAS_MIN_BYTES:
        return color_loss_ref(x)

    tile_budget, vmem_limit = _budgets()
    if max_tile_bytes is not None:
        tile_budget = max_tile_bytes

    # Lane-dense 2D view; free reshape for contiguous NCHW.  No padding.
    x2 = x.reshape(BC, HW)

    # Largest 128-multiple column tile under the budget, capped at what HW needs.
    cap = max(_LANE, (tile_budget // (BC * itemsize)) // _LANE * _LANE)
    tn = min(cap, pl.cdiv(HW, _LANE) * _LANE)

    n_ct_total = pl.cdiv(HW, tn)
    n_split = _NUM_COL_SPLITS if n_ct_total >= _NUM_COL_SPLITS else 1
    n_ct_per_split = pl.cdiv(n_ct_total, n_split)

    def x_index_map(s, k):
        # Clamp so the DMA window of a duplicate tile (odd tile count split
        # 2 ways) stays in bounds; its contribution is masked to 0 in-kernel.
        return (0, jnp.minimum(s * n_ct_per_split + k, n_ct_total - 1))

    kernel = functools.partial(_channel_sum_kernel, hw=HW, tn=tn,
                               n_ct_per_split=n_ct_per_split)

    partial_sums = pl.pallas_call(
        kernel,
        out_shape=jax.ShapeDtypeStruct((n_split, BC, 1), jnp.float32),
        grid_spec=pltpu.PrefetchScalarGridSpec(
            num_scalar_prefetch=0,
            grid=(n_split, n_ct_per_split),
            in_specs=[pl.BlockSpec((BC, tn), x_index_map)],
            out_specs=pl.BlockSpec((1, BC, 1), lambda s, k: (s, 0, 0)),
        ),
        compiler_params=pltpu.CompilerParams(
            dimension_semantics=("parallel", "arbitrary"),
            vmem_limit_bytes=vmem_limit,
        ),
        cost_estimate=pl.CostEstimate(
            flops=BC * HW,
            transcendentals=0,
            bytes_accessed=BC * HW * itemsize + n_split * BC * 4,
        ),
    )(x2)

    # Tiny O(B*3) tail in plain JAX (true HW, not padded).
    sums = jnp.sum(partial_sums[:, :, 0], axis=0)            # (BC,)
    mean_rgb = sums.reshape(B, C) / jnp.float32(HW)
    d = (mean_rgb - 0.5) ** 2
    k = jnp.sqrt(jnp.sum(d * d, axis=1))                     # (B,)
    return k.reshape(B, 1, 1, 1).astype(x.dtype)


if __name__ == "__main__":
    key = jax.random.PRNGKey(0)
    k0, k1, k2 = jax.random.split(key, 3)

    # 1) Tiny input: wrapper falls back to the fused XLA reduction.
    x_small = jax.random.uniform(k0, (2, 3, 16, 16), dtype=jnp.float32)
    out_small = jax.block_until_ready(color_loss(x_small))
    ref_small = color_loss_ref(x_small)
    assert out_small.shape == (2, 1, 1, 1)
    assert jnp.allclose(out_small, ref_small, atol=1e-6, rtol=1e-5), (out_small, ref_small)

    # 2) Pallas path, ragged spatial size (H*W = 1961, not a multiple of 128):
    #    single partial column tile, exercises the in-kernel mask.
    x_ragged = jax.random.uniform(k1, (2, 3, 37, 53), dtype=jnp.float32)
    out_ragged = jax.block_until_ready(color_loss(x_ragged, force_pallas=True))
    ref_ragged = color_loss_ref(x_ragged)
    assert out_ragged.shape == (2, 1, 1, 1)
    assert jnp.allclose(out_ragged, ref_ragged, atol=1e-6, rtol=1e-5), (out_ragged, ref_ragged)

    # 3) Pallas path with a deliberately tiny tile budget: H*W = 1890 → 15
    #    column tiles of 128, split 2 ways (odd count → one clamped+masked
    #    duplicate tile), multi-step f32 accumulation per split.
    x_split = jax.random.uniform(k2, (2, 3, 42, 45), dtype=jnp.float32)
    out_split = jax.block_until_ready(
        color_loss(x_split, force_pallas=True, max_tile_bytes=3 * 1024))
    ref_split = color_loss_ref(x_split)
    assert out_split.shape == (2, 1, 1, 1)
    assert jnp.allclose(out_split, ref_split, atol=1e-6, rtol=1e-5), (out_split, ref_split)

    print("KERNEL_OK")
</pallas_src>

<mosaic_0001>
module attributes {stable_mosaic.version = 11 : i64} {
  func.func @_channel_sum_kernel(%arg0: i32, %arg1: i32, %arg2: memref<6x2048xf32, #tpu.memory_space<vmem>>, %arg3: memref<1x6x1xf32, #tpu.memory_space<vmem>>) attributes {dimension_semantics = [#tpu.dimension_semantics<parallel>, #tpu.dimension_semantics<arbitrary>], iteration_bounds = array<i64: 1, 1>, scalar_prefetch = 0 : i64, scratch_operands = 0 : i64, tpu.core_type = #tpu.core_type<tc>, window_params = [{transform_indices = @transform_0, window_bounds = array<i64: 6, 2048>}, {transform_indices = @transform_1, window_bounds = array<i64: 1, 6, 1>}]} {
    %c0_i32 = arith.constant 0 : i32
    %0 = arith.cmpi eq, %arg1, %c0_i32 : i32
    %1 = arith.extui %0 : i1 to i32
    %c0_i32_0 = arith.constant 0 : i32
    %2 = arith.cmpi ne, %1, %c0_i32_0 : i32
    scf.if %2 {
      %cst_9 = arith.constant 0.000000e+00 : f32
      %21 = vector.broadcast %cst_9 : f32 to vector<1x6x1xf32>
      %c0_10 = arith.constant 0 : index
      %c0_11 = arith.constant 0 : index
      %c0_12 = arith.constant 0 : index
      %22 = vector.load %arg3[%c0_10, %c0_11, %c0_12] : memref<1x6x1xf32, #tpu.memory_space<vmem>>, vector<1x6x1xf32>
      tpu.vector_store %arg3[%c0_10, %c0_11, %c0_12], %21 {strides = array<i32>} : memref<1x6x1xf32, #tpu.memory_space<vmem>>, vector<1x6x1xf32>,
    } else {
    }
    %c1_i32 = arith.constant 1 : i32
    %3 = arith.muli %arg0, %c1_i32 : i32
    %4 = arith.addi %3, %arg1 : i32
    %c2048_i32 = arith.constant 2048 : i32
    %5 = arith.muli %4, %c2048_i32 : i32
    %6 = tpu.iota {dimensions = array<i32: 1>} : vector<6x2048xi32>
    %7 = vector.broadcast %5 : i32 to vector<6x2048xi32>
    %8 = arith.addi %7, %6 : vector<6x2048xi32>
    %c1961_i32 = arith.constant 1961 : i32
    %9 = vector.broadcast %c1961_i32 : i32 to vector<6x2048xi32>
    %10 = arith.cmpi slt, %8, %9 : vector<6x2048xi32>
    %c0 = arith.constant 0 : index
    %c0_1 = arith.constant 0 : index
    %11 = vector.load %arg2[%c0, %c0_1] : memref<6x2048xf32, #tpu.memory_space<vmem>>, vector<6x2048xf32>
    %c0_i32_2 = arith.constant 0 : i32
    %12 = arith.sitofp %c0_i32_2 : i32 to f32
    %13 = vector.broadcast %12 : f32 to vector<6x2048xf32>
    %14 = arith.select %10, %11, %13 : vector<6x2048xi1>, vector<6x2048xf32>
    %c0_3 = arith.constant 0 : index
    %c0_4 = arith.constant 0 : index
    %c0_5 = arith.constant 0 : index
    %15 = vector.load %arg3[%c0_3, %c0_4, %c0_5] : memref<1x6x1xf32, #tpu.memory_space<vmem>>, vector<1x6x1xf32>
    %cst = arith.constant dense<0.000000e+00> : vector<6xf32>
    %16 = vector.multi_reduction <add>, %14, %cst [1] : vector<6x2048xf32> to vector<6xf32>
    %17 = vector.shape_cast %16 : vector<6xf32> to vector<6x1xf32>
    %18 = vector.shape_cast %17 : vector<6x1xf32> to vector<1x6x1xf32>
    %19 = arith.addf %15, %18 : vector<1x6x1xf32>
    %c0_6 = arith.constant 0 : index
    %c0_7 = arith.constant 0 : index
    %c0_8 = arith.constant 0 : index
    %20 = vector.load %arg3[%c0_6, %c0_7, %c0_8] : memref<1x6x1xf32, #tpu.memory_space<vmem>>, vector<1x6x1xf32>
    tpu.vector_store %arg3[%c0_6, %c0_7, %c0_8], %19 {strides = array<i32>} : memref<1x6x1xf32, #tpu.memory_space<vmem>>, vector<1x6x1xf32>,
    return
  }
  func.func @transform_0(%arg0: i32, %arg1: i32) -> (i32, i32) {
    %c1_i32 = arith.constant 1 : i32
    %0 = arith.muli %arg0, %c1_i32 : i32
    %1 = arith.addi %0, %arg1 : i32
    %c0_i32 = arith.constant 0 : i32
    %2 = arith.minsi %1, %c0_i32 : i32
    %c0_i32_0 = arith.constant 0 : i32
    %c0_i32_1 = arith.constant 0 : i32
    return %c0_i32_0, %2 : i32, i32
  }
  func.func @transform_1(%arg0: i32, %arg1: i32) -> (i32, i32, i32) {
    %c0_i32 = arith.constant 0 : i32
    %c0_i32_0 = arith.constant 0 : i32
    %c0_i32_1 = arith.constant 0 : i32
    return %arg0, %c0_i32, %c0_i32_0 : i32, i32, i32
  }
}

</mosaic_0001>

<llo_original>
// kernel: tpu_custom_call.1
$region0: #{tpu_custom_call.1}
  #allocation0 [shape = 'u32[]', space=smem, size = 0x4, offset = 0x4, fixed_abs, tag = 'smem constant byte address 0x4 - core index']
  #allocation1 [shape = 'u32[144,128]{1,0:T(1,128)}', space=vmem, size = 0x12000, scoped, tag = 'internal scratch']
  %s0 = inlined_call_operand.hbm [shape: f32[6,1961], index: 0, kind: input, shape index: {}]
  %s1 = inlined_call_operand.vmem [shape: f32[1,6,1], index: 1, kind: output, shape index: {}]
  %s2 = sld [smem:[#allocation0]]
  $region22: #{tpu_custom_call.1} parent=0
    _
  %s4 = ssub.s32 1, %s2
  %s5 = scalar_select 0, %s4, %s2
  $region1: #{tpu_custom_call.1} parent=0
    #allocation2 [shape = 'u8[65536]{0}', space=vmem, size = 0x10000, scoped, tag = 'input window, operand 0, single buffered']
    #allocation3 [shape = 's32[1]{0}', space=sflag, size = 0x4, scoped, tag = 'scoped memory for tpu_custom_call.1']
    %6 = vsyncpa [#allocation3], 0
    // Predicated region
    $region2: #{tpu_custom_call.1} parent=1 // pred_check
      _
    $region3: #{tpu_custom_call.1} parent=1 // pred_check_branch
      %8 = sbr.rel (0) target = $region5
    $region4: #{tpu_custom_call.1} parent=1 // pred_region
      %s9 = sadd.s32 0, 0
      %p10 = scmp.lt.s32.totalorder %s9, 0
      %s11 = scalar_select %p10, %s9, 0
      %s12 = smul.u32 16, %s11
      %s14 = ssub.s32 2048, 2048
      %15 = vsyncadd [#allocation3], %s14
      %s16 = smul.addr %s12, 128
      %s17 = scalar_lea.hbm %s0, %s16
      %s19 = sshll.u32 [#allocation2], 4
      %s20 = int_to_ptr.vmem [resolvable:$true] %s19
      %22 = dma.hbm_to_vmem [thread:$0]  %s17, 2048, %s20, [#allocation3]
    $region5: #{tpu_custom_call.1} parent=1 // pred_fallthru
      _
    // Predicated region
    $region6: #{tpu_custom_call.1} parent=1 // pred_check
      _
    $region7: #{tpu_custom_call.1} parent=1 // pred_check_branch
      %24 = sbr.rel (0) target = $region9
    $region8: #{tpu_custom_call.1} parent=1 // pred_region
      %25 = dma.done [#allocation3], 2048
    $region9: #{tpu_custom_call.1} parent=1 // pred_fallthru
      _
    %s26 = sadd.s32 0, 0
    %p27 = scmp.lt.s32.totalorder %s26, 0
    %s28 = scalar_select %p27, %s26, 0
    %s29 = smul.u32 16, %s28
    %p30 = scmp.eq.s32.totalorder 0, 0
    // Predicated region
    $region10: #{tpu_custom_call.1} parent=1 // pred_check
      %p31 = pneg %p30
    $region11: #{tpu_custom_call.1} parent=1 // pred_check_branch
      %33 = sbr.rel (%p31) target = $region13
    $region12: #{tpu_custom_call.1} parent=1 // pred_region
      %vm34 = vcmask 5120
      %35 = vst.msk [vmem:[%s1] sm:$0x3f] %vm34, 0.0
    $region13: #{tpu_custom_call.1} parent=1 // pred_fallthru
      _
    %s36 = sadd.s32 0, 0
    %s37 = smul.u32 %s36, 2048
    %v38 = vlaneseq
    %v39 = vand.u32 %v38, 127
    %v40 = vadd.s32 %v39, 128
    %v41 = vadd.s32 %v39, 256
    %v42 = vadd.s32 %v39, 384
    %v43 = vadd.s32 %v39, 512
    %v44 = vadd.s32 %v39, 640
    %v45 = vadd.s32 %v39, 768
    %v46 = vadd.s32 %v39, 896
    %v47 = vadd.s32 %v39, 1024
    %v48 = vadd.s32 %v39, 1152
    %v49 = vadd.s32 %v39, 1280
    %v50 = vadd.s32 %v39, 1408
    %v51 = vadd.s32 %v39, 1536
    %v52 = vadd.s32 %v39, 1664
    %v53 = vadd.s32 %v39, 1792
    %v54 = vadd.s32 %v39, 1920
    %v55 = vstv %s37
    %v56 = vadd.s32 %v55, %v39
    %v57 = vadd.s32 %v55, %v40
    %v58 = vadd.s32 %v55, %v41
    %v59 = vadd.s32 %v55, %v42
    %v60 = vadd.s32 %v55, %v43
    %v61 = vadd.s32 %v55, %v44
    %v62 = vadd.s32 %v55, %v45
    %v63 = vadd.s32 %v55, %v46
    %v64 = vadd.s32 %v55, %v47
    %v65 = vadd.s32 %v55, %v48
    %v66 = vadd.s32 %v55, %v49
    %v67 = vadd.s32 %v55, %v50
    %v68 = vadd.s32 %v55, %v51
    %v69 = vadd.s32 %v55, %v52
    %v70 = vadd.s32 %v55, %v53
    %v71 = vadd.s32 %v55, %v54
    %vm72 = vcmp.lt.s32.totalorder %v56, 1961
    %vm73 = vcmp.lt.s32.totalorder %v57, 1961
    %vm74 = vcmp.lt.s32.totalorder %v58, 1961
    %vm75 = vcmp.lt.s32.totalorder %v59, 1961
    %vm76 = vcmp.lt.s32.totalorder %v60, 1961
    %vm77 = vcmp.lt.s32.totalorder %v61, 1961
    %vm78 = vcmp.lt.s32.totalorder %v62, 1961
    %vm79 = vcmp.lt.s32.totalorder %v63, 1961
    %vm80 = vcmp.lt.s32.totalorder %v64, 1961
    %vm81 = vcmp.lt.s32.totalorder %v65, 1961
    %vm82 = vcmp.lt.s32.totalorder %v66, 1961
    %vm83 = vcmp.lt.s32.totalorder %v67, 1961
    %vm84 = vcmp.lt.s32.totalorder %v68, 1961
    %vm85 = vcmp.lt.s32.totalorder %v69, 1961
    %vm86 = vcmp.lt.s32.totalorder %v70, 1961
    %vm87 = vcmp.lt.s32.totalorder %v71, 1961
    %v88 = vld [vmem:[#allocation2] sm:$0x3f]
    %v89 = vld [vmem:[#allocation2 + $0x8] sm:$0x3f]
    %v90 = vld [vmem:[#allocation2 + $0x10] sm:$0x3f]
    %v91 = vld [vmem:[#allocation2 + $0x18] sm:$0x3f]
    %v92 = vld [vmem:[#allocation2 + $0x20] sm:$0x3f]
    %v93 = vld [vmem:[#allocation2 + $0x28] sm:$0x3f]
    %v94 = vld [vmem:[#allocation2 + $0x30] sm:$0x3f]
    %v95 = vld [vmem:[#allocation2 + $0x38] sm:$0x3f]
    %v96 = vld [vmem:[#allocation2 + $0x40] sm:$0x3f]
    %v97 = vld [vmem:[#allocation2 + $0x48] sm:$0x3f]
    %v98 = vld [vmem:[#allocation2 + $0x50] sm:$0x3f]
    %v99 = vld [vmem:[#allocation2 + $0x58] sm:$0x3f]
    %v100 = vld [vmem:[#allocation2 + $0x60] sm:$0x3f]
    %v101 = vld [vmem:[#allocation2 + $0x68] sm:$0x3f]
    %v102 = vld [vmem:[#allocation2 + $0x70] sm:$0x3f]
    %v103 = vld [vmem:[#allocation2 + $0x78] sm:$0x3f]
    %v104 = vsel %vm72, %v88, 0.0
    %v105 = vsel %vm73, %v89, 0.0
    %v106 = vsel %vm74, %v90, 0.0
    %v107 = vsel %vm75, %v91, 0.0
    %v108 = vsel %vm76, %v92, 0.0
    %v109 = vsel %vm77, %v93, 0.0
    %v110 = vsel %vm78, %v94, 0.0
    %v111 = vsel %vm79, %v95, 0.0
    %v112 = vsel %vm80, %v96, 0.0
    %v113 = vsel %vm81, %v97, 0.0
    %v114 = vsel %vm82, %v98, 0.0
    %v115 = vsel %vm83, %v99, 0.0
    %v116 = vsel %vm84, %v100, 0.0
    %v117 = vsel %vm85, %v101, 0.0
    %v118 = vsel %vm86, %v102, 0.0
    %v119 = vsel %vm87, %v103, 0.0
    %v120 = vld [vmem:[%s1] sm:$0x3f]
    %vm121 = vcmask 1045504
    %v122 = vsel %vm121, %v104, 0.0
    %v123 = vsel %vm121, %v105, 0.0
    %v124 = vadd.f32 %v122, %v123
    %v125 = vsel %vm121, %v106, 0.0
    %v126 = vadd.f32 %v124, %v125
    %v127 = vsel %vm121, %v107, 0.0
    %v128 = vadd.f32 %v126, %v127
    %v129 = vsel %vm121, %v108, 0.0
    %v130 = vadd.f32 %v128, %v129
    %v131 = vsel %vm121, %v109, 0.0
    %v132 = vadd.f32 %v130, %v131
    %v133 = vsel %vm121, %v110, 0.0
    %v134 = vadd.f32 %v132, %v133
    %v135 = vsel %vm121, %v111, 0.0
    %v136 = vadd.f32 %v134, %v135
    %v137 = vsel %vm121, %v112, 0.0
    %v138 = vadd.f32 %v136, %v137
    %v139 = vsel %vm121, %v113, 0.0
    %v140 = vadd.f32 %v138, %v139
    %v141 = vsel %vm121, %v114, 0.0
    %v142 = vadd.f32 %v140, %v141
    %v143 = vsel %vm121, %v115, 0.0
    %v144 = vadd.f32 %v142, %v143
    %v145 = vsel %vm121, %v116, 0.0
    %v146 = vadd.f32 %v144, %v145
    %v147 = vsel %vm121, %v117, 0.0
    %v148 = vadd.f32 %v146, %v147
    %v149 = vsel %vm121, %v118, 0.0
    %v150 = vadd.f32 %v148, %v149
    %v151 = vsel %vm121, %v119, 0.0
    %v152 = vadd.f32 %v150, %v151
    %153 = vadd.xlane.f32.xlu0 %v152
    %v154 = vpop.xlane.xlu0 %153
    %v155 = vadd.f32 %v120, %v154
    %vm156 = vcmask 5120
    %157 = vst.msk [vmem:[%s1] sm:$0x3f] %vm156, %v155
    // Predicated region
    $region14: #{tpu_custom_call.1} parent=1 // pred_check
      _
    $region15: #{tpu_custom_call.1} parent=1 // pred_check_branch
      %159 = sbr.rel (0) target = $region17
    $region16: #{tpu_custom_call.1} parent=1 // pred_region
      _
    $region17: #{tpu_custom_call.1} parent=1 // pred_fallthru
      _
    // Predicated region
    $region18: #{tpu_custom_call.1} parent=1 // pred_check
      _
    $region19: #{tpu_custom_call.1} parent=1 // pred_check_branch
      %161 = sbr.rel (0) target = $region21
    $region20: #{tpu_custom_call.1} parent=1 // pred_region
      _
    $region21: #{tpu_custom_call.1} parent=1 // pred_fallthru
      _
    %162 = vsyncpa [#allocation3], 1

</llo_original>
